<compile_context>
chip_gen: v7x
topology: tpu7x:2x2x1
jax: 0.10.0
libtpu: 0.0.40
codegen_flags: <defaults>
</compile_context>

<pallas_src>
import functools
import math

import jax
import jax.numpy as jnp
from jax.experimental import pallas as pl
from jax.experimental.pallas import tpu as pltpu


_LOG_LO = math.log(1e-8)
_LOG_HI = math.log(1.0 - 1e-8)


def _focal_loss_kernel(logit_ref, target_ref, cw_ref, out_ref, acc_ref,
                       *, gamma, n_total, hw, needs_mask):
    b = pl.program_id(0)
    j = pl.program_id(1)
    nb = pl.num_programs(0)
    nj = pl.num_programs(1)

    @pl.when((b == 0) & (j == 0))
    def _():
        acc_ref[...] = jnp.zeros_like(acc_ref)

    logits = logit_ref[...].astype(jnp.float32)   # (C, T)  C on sublanes, spatial on lanes
    tgt = target_ref[...]                         # (1, T) int32
    cw = cw_ref[...].astype(jnp.float32)          # (C, 1)

    c, t = logits.shape

    # log-sum-exp over the class (sublane) axis
    m = jnp.max(logits, axis=0, keepdims=True)                # (1, T)
    e = jnp.exp(logits - m)                                   # (C, T)
    lse = jnp.log(jnp.sum(e, axis=0, keepdims=True))          # (1, T)

    # one-hot gather of the target-class logit and the per-class weight
    class_iota = jax.lax.broadcasted_iota(jnp.int32, (c, t), 0)
    onehot = (class_iota == tgt).astype(jnp.float32)          # (C, T)
    z_t = jnp.sum(logits * onehot, axis=0, keepdims=True)     # (1, T)
    w = jnp.sum(cw * onehot, axis=0, keepdims=True)           # (1, T)

    log_p = (z_t - m) - lse                                   # (1, T)
    p = jnp.clip(jnp.exp(log_p), 1e-8, 1.0 - 1e-8)
    log_p = jnp.clip(log_p, _LOG_LO, _LOG_HI)                 # == log(clip(p))

    one_m_p = 1.0 - p
    g = float(gamma)
    if g == int(g) and 0 <= int(g) <= 8:
        gi = int(g)
        if gi == 0:
            focal = jnp.ones_like(one_m_p)
        else:
            focal = one_m_p
            for _ in range(gi - 1):
                focal = focal * one_m_p                       # VPU multiplies only
    else:
        focal = jnp.power(one_m_p, g)

    loss = -(w * focal * log_p)                               # (1, T)

    if needs_mask:
        lane = jax.lax.broadcasted_iota(jnp.int32, (1, t), 1)
        valid = (j * t + lane) < hw
        loss = jnp.where(valid, loss, 0.0)

    # lane-vector accumulator: pure VPU add per step, no cross-lane reduce
    acc_ref[...] = acc_ref[...] + loss

    @pl.when((b == nb - 1) & (j == nj - 1))
    def _():
        out_ref[...] = (jnp.sum(acc_ref[...], axis=1, keepdims=True)
                        / jnp.float32(n_total))


def focal_loss_2d(logit, target, class_weight=None, gamma=2.0,
                  block_cols=8192):
    """FocalLoss2d.forward(logit, target, class_weight, type='softmax'),
    with size_average=True (mean over all pixels)."""
    B, C, H, W = logit.shape
    HW = H * W
    N = B * HW

    # NCHW consumed directly as (B, C, HW): a view, no transpose, no upcast.
    x = logit.reshape(B, C, HW)
    t = target.reshape(B, 1, HW).astype(jnp.int32)
    if class_weight is None:
        cw = jnp.ones((C, 1), jnp.float32)
    else:
        cw = jnp.asarray(class_weight, jnp.float32).reshape(C, 1)

    # Spatial tile: multiple of 128 on the lane axis, capped so a single
    # logits block stays <= ~4 MiB (safe double-buffered on v5e/v6e/v7x).
    itemsize = jnp.dtype(x.dtype).itemsize
    vmem_cap = max(128, ((4 * 1024 * 1024) // (C * itemsize)) // 128 * 128)
    if HW <= 128:
        tile = HW
    else:
        tile = min(block_cols, (HW // 128) * 128, vmem_cap)
    n_tiles = pl.cdiv(HW, tile)
    needs_mask = (HW % tile) != 0

    kernel = functools.partial(_focal_loss_kernel, gamma=float(gamma),
                               n_total=N, hw=HW, needs_mask=needs_mask)

    out = pl.pallas_call(
        kernel,
        out_shape=jax.ShapeDtypeStruct((1, 1), jnp.float32),
        grid_spec=pltpu.PrefetchScalarGridSpec(
            num_scalar_prefetch=0,
            grid=(B, n_tiles),
            in_specs=[
                pl.BlockSpec((None, C, tile), lambda b, j: (b, 0, j)),
                pl.BlockSpec((None, 1, tile), lambda b, j: (b, 0, j)),
                pl.BlockSpec((C, 1), lambda b, j: (0, 0)),
            ],
            out_specs=pl.BlockSpec((1, 1), lambda b, j: (0, 0)),
            scratch_shapes=[pltpu.VMEM((1, tile), jnp.float32)],
        ),
        compiler_params=pltpu.CompilerParams(
            dimension_semantics=("arbitrary", "arbitrary")),
    )(x, t, cw)
    return out[0, 0]


def _reference_focal_loss(logit, target, class_weight=None, gamma=2.0):
    B, C, H, W = logit.shape
    x = jnp.transpose(logit, (0, 2, 3, 1)).reshape(-1, C).astype(jnp.float32)
    t = target.reshape(-1).astype(jnp.int32)
    if class_weight is None:
        cw = jnp.ones((C,), jnp.float32)
    else:
        cw = jnp.asarray(class_weight, jnp.float32)
    prob = jax.nn.softmax(x, axis=1)
    p = jnp.take_along_axis(prob, t[:, None], axis=1)
    p = jnp.clip(p, 1e-8, 1.0 - 1e-8)
    w = cw[t][:, None]
    loss = -w * jnp.power(1.0 - p, gamma) * jnp.log(p)
    return jnp.mean(loss)


if __name__ == "__main__":
    key = jax.random.PRNGKey(0)
    k1, k2 = jax.random.split(key)

    B, C, H, W = 2, 4, 16, 16
    logit = jax.random.normal(k1, (B, C, H, W), dtype=jnp.float32)
    target = jax.random.randint(k2, (B, H, W), 0, C, dtype=jnp.int32)

    # unweighted
    loss = jax.block_until_ready(focal_loss_2d(logit, target, gamma=2.0))
    ref = _reference_focal_loss(logit, target, gamma=2.0)
    assert jnp.allclose(loss, ref, rtol=1e-5, atol=1e-6), (loss, ref)

    # class-weighted
    cw = [0.5, 1.0, 1.5, 2.0]
    loss_w = jax.block_until_ready(
        focal_loss_2d(logit, target, class_weight=cw, gamma=2.0))
    ref_w = _reference_focal_loss(logit, target, class_weight=cw, gamma=2.0)
    assert jnp.allclose(loss_w, ref_w, rtol=1e-5, atol=1e-6), (loss_w, ref_w)

    # non-divisible spatial extent (exercises the in-kernel tail mask)
    k3, k4 = jax.random.split(k1)
    B2, C2, H2, W2 = 2, 4, 15, 20   # HW = 300, not a multiple of 128
    logit2 = jax.random.normal(k3, (B2, C2, H2, W2), dtype=jnp.float32)
    target2 = jax.random.randint(k4, (B2, H2, W2), 0, C2, dtype=jnp.int32)
    loss2 = jax.block_until_ready(focal_loss_2d(logit2, target2, gamma=2.0))
    ref2 = _reference_focal_loss(logit2, target2, gamma=2.0)
    assert jnp.allclose(loss2, ref2, rtol=1e-5, atol=1e-6), (loss2, ref2)

    print("KERNEL_OK")
</pallas_src>

<mosaic_0001>
module attributes {stable_mosaic.version = 11 : i64} {
  func.func @_focal_loss_kernel(%arg0: i32, %arg1: i32, %arg2: memref<1x4x256xf32, #tpu.memory_space<vmem>>, %arg3: memref<1x1x256xi32, #tpu.memory_space<vmem>>, %arg4: memref<4x1xf32, #tpu.memory_space<vmem>>, %arg5: memref<1x1xf32, #tpu.memory_space<vmem>>, %arg6: memref<1x256xf32, #tpu.memory_space<vmem>>) attributes {dimension_semantics = [#tpu.dimension_semantics<arbitrary>, #tpu.dimension_semantics<arbitrary>], iteration_bounds = array<i64: 2, 1>, scalar_prefetch = 0 : i64, scratch_operands = 1 : i64, tpu.core_type = #tpu.core_type<tc>, window_params = [{transform_indices = @transform_0, window_bounds = array<i64: 1, 4, 256>}, {transform_indices = @transform_1, window_bounds = array<i64: 1, 1, 256>}, {pipeline_mode = #tpu.pipeline_mode<synchronous>, transform_indices = @transform_2, window_bounds = array<i64: 4, 1>}, {pipeline_mode = #tpu.pipeline_mode<synchronous>, transform_indices = @transform_3, window_bounds = array<i64: 1, 1>}]} {
    %c0_i32 = arith.constant 0 : i32
    %0 = arith.cmpi eq, %arg0, %c0_i32 : i32
    %c0_i32_0 = arith.constant 0 : i32
    %1 = arith.cmpi eq, %arg1, %c0_i32_0 : i32
    %2 = arith.andi %0, %1 : i1
    %3 = arith.extui %2 : i1 to i32
    %c0_i32_1 = arith.constant 0 : i32
    %4 = arith.cmpi ne, %3, %c0_i32_1 : i32
    scf.if %4 {
      %cst_24 = arith.constant 0.000000e+00 : f32
      %56 = vector.broadcast %cst_24 : f32 to vector<1x256xf32>
      %c0_25 = arith.constant 0 : index
      %c0_26 = arith.constant 0 : index
      %57 = vector.load %arg6[%c0_25, %c0_26] : memref<1x256xf32, #tpu.memory_space<vmem>>, vector<1x256xf32>
      tpu.vector_store %arg6[%c0_25, %c0_26], %56 {strides = array<i32>} : memref<1x256xf32, #tpu.memory_space<vmem>>, vector<1x256xf32>,
    } else {
    }
    %c0 = arith.constant 0 : index
    %c0_2 = arith.constant 0 : index
    %c0_3 = arith.constant 0 : index
    %5 = vector.load %arg2[%c0, %c0_2, %c0_3] : memref<1x4x256xf32, #tpu.memory_space<vmem>>, vector<1x4x256xf32>
    %6 = vector.shape_cast %5 : vector<1x4x256xf32> to vector<4x256xf32>
    %c0_4 = arith.constant 0 : index
    %c0_5 = arith.constant 0 : index
    %c0_6 = arith.constant 0 : index
    %7 = vector.load %arg3[%c0_4, %c0_5, %c0_6] : memref<1x1x256xi32, #tpu.memory_space<vmem>>, vector<1x1x256xi32>
    %8 = vector.shape_cast %7 : vector<1x1x256xi32> to vector<1x256xi32>
    %c0_7 = arith.constant 0 : index
    %c0_8 = arith.constant 0 : index
    %9 = vector.load %arg4[%c0_7, %c0_8] : memref<4x1xf32, #tpu.memory_space<vmem>>, vector<4x1xf32>
    %cst = arith.constant dense<0xFF800000> : vector<256xf32>
    %10 = vector.multi_reduction <maximumf>, %6, %cst [0] : vector<4x256xf32> to vector<256xf32>
    %11 = vector.shape_cast %10 : vector<256xf32> to vector<1x256xf32>
    %12 = vector.broadcast %11 : vector<1x256xf32> to vector<4x256xf32>
    %13 = arith.subf %6, %12 : vector<4x256xf32>
    %14 = math.exp %13 : vector<4x256xf32>
    %cst_9 = arith.constant dense<0.000000e+00> : vector<256xf32>
    %15 = vector.multi_reduction <add>, %14, %cst_9 [0] : vector<4x256xf32> to vector<256xf32>
    %16 = vector.shape_cast %15 : vector<256xf32> to vector<1x256xf32>
    %17 = math.log %16 : vector<1x256xf32>
    %18 = tpu.iota {dimensions = array<i32: 0>} : vector<4x256xi32>
    %19 = vector.broadcast %8 : vector<1x256xi32> to vector<4x256xi32>
    %20 = arith.cmpi eq, %18, %19 : vector<4x256xi32>
    %21 = arith.extui %20 : vector<4x256xi1> to vector<4x256xi32>
    %22 = arith.sitofp %21 : vector<4x256xi32> to vector<4x256xf32>
    %23 = arith.mulf %6, %22 : vector<4x256xf32>
    %cst_10 = arith.constant dense<0.000000e+00> : vector<256xf32>
    %24 = vector.multi_reduction <add>, %23, %cst_10 [0] : vector<4x256xf32> to vector<256xf32>
    %25 = vector.shape_cast %24 : vector<256xf32> to vector<1x256xf32>
    %26 = vector.broadcast %9 : vector<4x1xf32> to vector<4x256xf32>
    %27 = arith.mulf %26, %22 : vector<4x256xf32>
    %cst_11 = arith.constant dense<0.000000e+00> : vector<256xf32>
    %28 = vector.multi_reduction <add>, %27, %cst_11 [0] : vector<4x256xf32> to vector<256xf32>
    %29 = vector.shape_cast %28 : vector<256xf32> to vector<1x256xf32>
    %30 = arith.subf %25, %11 : vector<1x256xf32>
    %31 = arith.subf %30, %17 : vector<1x256xf32>
    %32 = math.exp %31 : vector<1x256xf32>
    %cst_12 = arith.constant 9.99999993E-9 : f32
    %cst_13 = arith.constant 1.000000e+00 : f32
    %33 = vector.broadcast %cst_12 : f32 to vector<1x256xf32>
    %34 = arith.maximumf %33, %32 : vector<1x256xf32>
    %35 = vector.broadcast %cst_13 : f32 to vector<1x256xf32>
    %36 = arith.minimumf %35, %34 : vector<1x256xf32>
    %cst_14 = arith.constant -18.420681 : f32
    %cst_15 = arith.constant -9.99999993E-9 : f32
    %37 = vector.broadcast %cst_14 : f32 to vector<1x256xf32>
    %38 = arith.maximumf %37, %31 : vector<1x256xf32>
    %39 = vector.broadcast %cst_15 : f32 to vector<1x256xf32>
    %40 = arith.minimumf %39, %38 : vector<1x256xf32>
    %cst_16 = arith.constant 1.000000e+00 : f32
    %41 = vector.broadcast %cst_16 : f32 to vector<1x256xf32>
    %42 = arith.subf %41, %36 : vector<1x256xf32>
    %43 = arith.mulf %42, %42 : vector<1x256xf32>
    %44 = arith.mulf %29, %43 : vector<1x256xf32>
    %45 = arith.mulf %44, %40 : vector<1x256xf32>
    %cst_17 = arith.constant 0.000000e+00 : f32
    %46 = vector.broadcast %cst_17 : f32 to vector<1x256xf32>
    %47 = arith.subf %46, %45 : vector<1x256xf32>
    %c0_18 = arith.constant 0 : index
    %c0_19 = arith.constant 0 : index
    %48 = vector.load %arg6[%c0_18, %c0_19] : memref<1x256xf32, #tpu.memory_space<vmem>>, vector<1x256xf32>
    %49 = arith.addf %48, %47 : vector<1x256xf32>
    %c0_20 = arith.constant 0 : index
    %c0_21 = arith.constant 0 : index
    %50 = vector.load %arg6[%c0_20, %c0_21] : memref<1x256xf32, #tpu.memory_space<vmem>>, vector<1x256xf32>
    tpu.vector_store %arg6[%c0_20, %c0_21], %49 {strides = array<i32>} : memref<1x256xf32, #tpu.memory_space<vmem>>, vector<1x256xf32>,
    %c1_i32 = arith.constant 1 : i32
    %51 = arith.cmpi eq, %arg0, %c1_i32 : i32
    %c0_i32_22 = arith.constant 0 : i32
    %52 = arith.cmpi eq, %arg1, %c0_i32_22 : i32
    %53 = arith.andi %51, %52 : i1
    %54 = arith.extui %53 : i1 to i32
    %c0_i32_23 = arith.constant 0 : i32
    %55 = arith.cmpi ne, %54, %c0_i32_23 : i32
    scf.if %55 {
      %c0_24 = arith.constant 0 : index
      %c0_25 = arith.constant 0 : index
      %56 = vector.load %arg6[%c0_24, %c0_25] : memref<1x256xf32, #tpu.memory_space<vmem>>, vector<1x256xf32>
      %cst_26 = arith.constant dense<0.000000e+00> : vector<1xf32>
      %57 = vector.multi_reduction <add>, %56, %cst_26 [1] : vector<1x256xf32> to vector<1xf32>
      %58 = vector.shape_cast %57 : vector<1xf32> to vector<1x1xf32>
      %cst_27 = arith.constant 5.120000e+02 : f32
      %59 = vector.broadcast %cst_27 : f32 to vector<1x1xf32>
      %60 = arith.divf %58, %59 : vector<1x1xf32>
      %c0_28 = arith.constant 0 : index
      %c0_29 = arith.constant 0 : index
      %61 = vector.load %arg5[%c0_28, %c0_29] : memref<1x1xf32, #tpu.memory_space<vmem>>, vector<1x1xf32>
      tpu.vector_store %arg5[%c0_28, %c0_29], %60 {strides = array<i32>} : memref<1x1xf32, #tpu.memory_space<vmem>>, vector<1x1xf32>,
    } else {
    }
    return
  }
  func.func @transform_0(%arg0: i32, %arg1: i32) -> (i32, i32, i32) {
    %c0_i32 = arith.constant 0 : i32
    %c0_i32_0 = arith.constant 0 : i32
    return %arg0, %c0_i32, %arg1 : i32, i32, i32
  }
  func.func @transform_1(%arg0: i32, %arg1: i32) -> (i32, i32, i32) {
    %c0_i32 = arith.constant 0 : i32
    %c0_i32_0 = arith.constant 0 : i32
    return %arg0, %c0_i32, %arg1 : i32, i32, i32
  }
  func.func @transform_2(%arg0: i32, %arg1: i32) -> (i32, i32) {
    %c0_i32 = arith.constant 0 : i32
    %c0_i32_0 = arith.constant 0 : i32
    %c0_i32_1 = arith.constant 0 : i32
    return %c0_i32, %c0_i32_0 : i32, i32
  }
  func.func @transform_3(%arg0: i32, %arg1: i32) -> (i32, i32) {
    %c0_i32 = arith.constant 0 : i32
    %c0_i32_0 = arith.constant 0 : i32
    %c0_i32_1 = arith.constant 0 : i32
    return %c0_i32, %c0_i32_0 : i32, i32
  }
}

</mosaic_0001>

<llo_original>
// kernel: tpu_custom_call.1
$region0: #{tpu_custom_call.1}
  #allocation0 [shape = 'u32[]', space=smem, size = 0x4, offset = 0x4, fixed_abs, tag = 'smem constant byte address 0x4 - core index']
  #allocation1 [shape = 'u32[144,128]{1,0:T(1,128)}', space=vmem, size = 0x12000, scoped, tag = 'internal scratch']
  #allocation2 [shape = 'f32[1,256]{1,0:T(1,128)}', space=vmem, size = 0x400, scoped, tag = 'scratch operand']
  %s0 = inlined_call_operand.hbm [shape: f32[2,4,256], index: 0, kind: input, shape index: {}]
  %s1 = inlined_call_operand.vmem [shape: s32[2,1,256], index: 1, kind: input, shape index: {}]
  %s2 = inlined_call_operand.vmem [shape: f32[4,1], index: 2, kind: input, shape index: {}]
  %s3 = inlined_call_operand.hbm [shape: f32[1,1], index: 3, kind: output, shape index: {}]
  %s4 = sld [smem:[#allocation0]]
  $region57: #{tpu_custom_call.1} parent=0
    _
  %s6 = ssub.s32 1, %s4
  %s7 = scalar_select 0, %s6, %s4
  $region1: #{tpu_custom_call.1} parent=0
    #allocation3 [shape = 'u8[8192]{0}', space=vmem, size = 0x2000, scoped, tag = 'input window, operand 0']
    #allocation4 [shape = 's32[2]{0}', space=sflag, size = 0x8, scoped, tag = 'scoped memory for tpu_custom_call.1']
    #allocation5 [shape = 's32[2]{0}', space=sflag, size = 0x8, scoped, tag = 'scoped memory for tpu_custom_call.1']
    #allocation6 [shape = 'u8[512]{0}', space=vmem, size = 0x400, scoped, tag = 'output window, operand 0, single buffered']
    %8 = vsyncpa [#allocation4], 0
    %s9 = scalar_lea.sflag [#allocation4], 1
    %10 = vsyncpa %s9, 0
    %11 = vsyncpa [#allocation5], 0
    loop: start=0, step=1, limit=4
    $region2: #{tpu_custom_call.1} parent=1 // loop_pre_header
      _
    $region3: #{tpu_custom_call.1} parent=1 // loop_header
      %s13 = sphi 0, %s17
      %p14 = scmp.ge.s32.totalorder %s13, 4
      %s20 = sphi 0, %s32
      %s21 = sphi 0, %s28
      %s22 = sphi 0, %s20
      %s23 = sphi 0, %s21
      %s24 = sphi 0, %s22
      %s25 = sphi 0, %s23
      %s37 = sphi 0, %s39
      %s40 = sphi 0, %s37
      %s41 = sphi 0, %s40
      %s57 = sphi 0, %s41
      %s65 = sphi 0, %s67
      %s68 = sphi 0, %s65
      %s69 = sphi 0, %s68
      %s85 = sphi 0, %s69
      %s89 = sphi 0, %s89
      %s91 = sphi 0, %s89
      %s92 = sphi 0, %s91
      %s106 = sphi 0, %s92
      %s110 = sphi 0, %s110
      %s112 = sphi 0, %s110
      %s113 = sphi 0, %s112
      %s127 = sphi 0, %s113
    $region4: #{tpu_custom_call.1} parent=1 // loop_header_branch
      %16 = sbr.rel (%p14) target = $region8
    $region5: #{tpu_custom_call.1} parent=1 // loop_body
      %s18 = ssub.s32 %s13, 1
      %s19 = ssub.s32 %s13, 2
      %s26 = sadd.s32 1, %s21
      %p27 = scmp.ge.s32.totalorder %s26, 1
      %s28 = scalar_select %p27, 0, %s26
      %s29 = sadd.s32 1, %s20
      %s30 = scalar_select %p27, %s29, %s20
      %p31 = scmp.ge.s32.totalorder %s30, 2
      %s32 = scalar_select %p31, 0, %s30
      %s33 = ssub.s32 %s20, %s32
      %s34 = ssub.s32 %s21, %s28
      %s35 = sor.u32 %s33, %s34
      %p36 = scmp.eq.s32.totalorder %s35, 0
      %s38 = sadd.s32 %s37, 1
      %s39 = scalar_select %p36, %s37, %s38
      %p42 = pneg %p36
      %p43 = scmp.eq.s32.totalorder %s13, 1
      %p44 = por %p42, %p43
      %p45 = scmp.ne.s32.totalorder %s37, %s40
      %p46 = scmp.eq.s32.totalorder %s13, 0
      %p47 = por %p45, %p46
      %p48 = scmp.ne.s32.totalorder %s37, %s40
      %p49 = scmp.eq.s32.totalorder %s18, 1
      %p50 = por %p48, %p49
      %p51 = scmp.ne.s32.totalorder %s40, %s41
      %p52 = scmp.eq.s32.totalorder %s18, 0
      %p53 = por %p51, %p52
      %p54 = scmp.ne.s32.totalorder %s40, %s41
      %p55 = scmp.eq.s32.totalorder %s19, 1
      %p56 = por %p54, %p55
      %p58 = scmp.ne.s32.totalorder %s41, %s57
      %p59 = scmp.eq.s32.totalorder %s19, 0
      %p60 = por %p58, %p59
      %s61 = ssub.s32 %s20, %s32
      %s62 = ssub.s32 %s21, %s28
      %s63 = sor.u32 %s61, %s62
      %p64 = scmp.eq.s32.totalorder %s63, 0
      %s66 = sadd.s32 %s65, 1
      %s67 = scalar_select %p64, %s65, %s66
      %p70 = pneg %p64
      %p71 = scmp.eq.s32.totalorder %s13, 1
      %p72 = por %p70, %p71
      %p73 = scmp.ne.s32.totalorder %s65, %s68
      %p74 = scmp.eq.s32.totalorder %s13, 0
      %p75 = por %p73, %p74
      %p76 = scmp.ne.s32.totalorder %s65, %s68
      %p77 = scmp.eq.s32.totalorder %s18, 1
      %p78 = por %p76, %p77
      %p79 = scmp.ne.s32.totalorder %s68, %s69
      %p80 = scmp.eq.s32.totalorder %s18, 0
      %p81 = por %p79, %p80
      %p82 = scmp.ne.s32.totalorder %s68, %s69
      %p83 = scmp.eq.s32.totalorder %s19, 1
      %p84 = por %p82, %p83
      %p86 = scmp.ne.s32.totalorder %s69, %s85
      %p87 = scmp.eq.s32.totalorder %s19, 0
      %p88 = por %p86, %p87
      %s90 = sadd.s32 %s89, 1
      %p93 = scmp.eq.s32.totalorder %s13, 1
      %p94 = scmp.ne.s32.totalorder %s89, %s91
      %p95 = scmp.eq.s32.totalorder %s13, 0
      %p96 = por %p94, %p95
      %p97 = scmp.ne.s32.totalorder %s89, %s91
      %p98 = scmp.eq.s32.totalorder %s18, 1
      %p99 = por %p97, %p98
      %p100 = scmp.ne.s32.totalorder %s91, %s92
      %p101 = scmp.eq.s32.totalorder %s18, 0
      %p102 = por %p100, %p101
      %p103 = scmp.ne.s32.totalorder %s91, %s92
      %p104 = scmp.eq.s32.totalorder %s19, 1
      %p105 = por %p103, %p104
      %p107 = scmp.ne.s32.totalorder %s92, %s106
      %p108 = scmp.eq.s32.totalorder %s19, 0
      %p109 = por %p107, %p108
      %s111 = sadd.s32 %s110, 1
      %p114 = scmp.eq.s32.totalorder %s13, 1
      %p115 = scmp.ne.s32.totalorder %s110, %s112
      %p116 = scmp.eq.s32.totalorder %s13, 0
      %p117 = por %p115, %p116
      %p118 = scmp.ne.s32.totalorder %s110, %s112
      %p119 = scmp.eq.s32.totalorder %s18, 1
      %p120 = por %p118, %p119
      %p121 = scmp.ne.s32.totalorder %s112, %s113
      %p122 = scmp.eq.s32.totalorder %s18, 0
      %p123 = por %p121, %p122
      %p124 = scmp.ne.s32.totalorder %s112, %s113
      %p125 = scmp.eq.s32.totalorder %s19, 1
      %p126 = por %p124, %p125
      %p128 = scmp.ne.s32.totalorder %s113, %s127
      %p129 = scmp.eq.s32.totalorder %s19, 0
      %p130 = por %p128, %p129
      %p131 = scmp.le.s32.totalorder 1, %s13
      %p132 = scmp.lt.s32.totalorder %s13, 3
      %p133 = pnand %p131, %p132
      %p134 = pneg %p133
      // Predicated region
      $region9: #{tpu_custom_call.1} parent=5 // pred_check
        _
      $region10: #{tpu_custom_call.1} parent=5 // pred_check_branch
        %136 = sbr.rel (%p133) target = $region12
      $region11: #{tpu_custom_call.1} parent=5 // pred_region
        %s137 = ssub.s32 %s13, 1
        // Predicated region
        $region13: #{tpu_custom_call.1} parent=11 // pred_check
          %p138 = pneg %p102
        $region14: #{tpu_custom_call.1} parent=11 // pred_check_branch
          %140 = sbr.rel (%p138) target = $region16
        $region15: #{tpu_custom_call.1} parent=11 // pred_region
          _
        $region16: #{tpu_custom_call.1} parent=11 // pred_fallthru
          _
      $region12: #{tpu_custom_call.1} parent=5 // pred_fallthru
        _
      %p141 = scmp.lt.s32.totalorder %s13, 2
      // Predicated region
      $region17: #{tpu_custom_call.1} parent=5 // pred_check
        %p142 = pneg %p141
      $region18: #{tpu_custom_call.1} parent=5 // pred_check_branch
        %144 = sbr.rel (%p142) target = $region20
      $region19: #{tpu_custom_call.1} parent=5 // pred_region
        // Predicated region
        $region21: #{tpu_custom_call.1} parent=19 // pred_check
          %p145 = pneg %p47
        $region22: #{tpu_custom_call.1} parent=19 // pred_check_branch
          %147 = sbr.rel (%p145) target = $region24
        $region23: #{tpu_custom_call.1} parent=19 // pred_region
          %s148 = sand.u32 %s37, 1
          %s149 = scalar_lea.sflag [#allocation4], %s148
          %s150 = sand.u32 %s37, 1
          %s151 = smul.addr %s150, 8
          %s152 = scalar_lea.vmem [#allocation3], %s151
          %s153 = smul.u32 2, %s21
          %s155 = ssub.s32 128, 128
          %156 = vsyncadd %s149, %s155
          %s157 = smul.addr %s20, 2
          %s158 = sadd.s32 %s153, %s157
          %s159 = smul.addr %s158, 64
          %s160 = scalar_lea.hbm %s0, %s159
          %s162 = sshll.u32 %s152, 4
          %s163 = int_to_ptr.vmem [resolvable:$true] %s162
          %165 = dma.hbm_to_vmem [thread:$0]  %s160, 128, %s163, %s149
        $region24: #{tpu_custom_call.1} parent=19 // pred_fallthru
          _
        // Predicated region
        $region25: #{tpu_custom_call.1} parent=19 // pred_check
          %p166 = pneg %p75
        $region26: #{tpu_custom_call.1} parent=19 // pred_check_branch
          %168 = sbr.rel (%p166) target = $region28
        $region27: #{tpu_custom_call.1} parent=19 // pred_region
          %s169 = smul.u32 2, %s21
          %p170 = scmp.lt.s32.totalorder %s20, 1
          %s171 = scalar_select %p170, %s20, 1
          %p172 = scmp.lt.s32.totalorder %s169, 1
          %s173 = scalar_select %p172, %s169, 1
          %s174 = smul.addr %s171, 2
          %s175 = sadd.s32 %s173, %s174
          %s176 = scalar_lea.vmem %s1, %s175
          %s177 = smul.u32 2, %s21
        $region28: #{tpu_custom_call.1} parent=19 // pred_fallthru
          _
      $region20: #{tpu_custom_call.1} parent=5 // pred_fallthru
        _
      %p178 = scmp.le.s32.totalorder 1, %s13
      %p179 = scmp.lt.s32.totalorder %s13, 3
      %p180 = pnand %p178, %p179
      %p181 = pneg %p180
      // Predicated region
      $region29: #{tpu_custom_call.1} parent=5 // pred_check
        _
      $region30: #{tpu_custom_call.1} parent=5 // pred_check_branch
        %183 = sbr.rel (%p180) target = $region32
      $region31: #{tpu_custom_call.1} parent=5 // pred_region
        %s184 = ssub.s32 %s13, 1
        %s185 = sand.u32 %s40, 1
        %s186 = scalar_lea.sflag [#allocation4], %s185
        %s187 = sand.u32 %s40, 1
        %s188 = smul.addr %s187, 8
        %s189 = scalar_lea.vmem [#allocation3], %s188
        // Predicated region
        $region33: #{tpu_custom_call.1} parent=31 // pred_check
          %p190 = pneg %p53
        $region34: #{tpu_custom_call.1} parent=31 // pred_check_branch
          %192 = sbr.rel (%p190) target = $region36
        $region35: #{tpu_custom_call.1} parent=31 // pred_region
          %193 = dma.done %s186, 128
        $region36: #{tpu_custom_call.1} parent=31 // pred_fallthru
          _
        %s194 = sand.u32 %s40, 1
        %s195 = scalar_lea.sflag [#allocation4], %s194
        %s196 = sand.u32 %s40, 1
        %s197 = smul.addr %s196, 8
        %s198 = scalar_lea.vmem [#allocation3], %s197
        %p199 = pneg %p53
        %p200 = pneg %p50
        %s201 = smul.u32 2, %s23
        %p202 = scmp.lt.s32.totalorder %s22, 1
        %s203 = scalar_select %p202, %s22, 1
        %p204 = scmp.lt.s32.totalorder %s201, 1
        %s205 = scalar_select %p204, %s201, 1
        %s206 = smul.addr %s203, 2
        %s207 = sadd.s32 %s205, %s206
        %s208 = scalar_lea.vmem %s1, %s207
        %p209 = pneg %p81
        %p210 = pneg %p78
        %p211 = pneg %p102
        %p212 = pneg %p99
        %p213 = pneg %p123
        %p214 = pneg %p120
        %s215 = smul.u32 2, %s23
        %s216 = smul.u32 2, %s23
        %p217 = scmp.lt.s32.totalorder %s22, 1
        %s218 = scalar_select %p217, %s22, 1
        %p219 = scmp.lt.s32.totalorder %s216, 1
        %s220 = scalar_select %p219, %s216, 1
        %s221 = smul.addr %s218, 2
        %s222 = sadd.s32 %s220, %s221
        %s223 = scalar_lea.vmem %s1, %s222
        %s224 = smul.u32 2, %s23
        %p225 = scmp.eq.s32.totalorder %s22, 0
        %p226 = scmp.eq.s32.totalorder %s23, 0
        %p227 = pnand %p225, %p226
        %p228 = pneg %p227
        // Predicated region
        $region37: #{tpu_custom_call.1} parent=31 // pred_check
          _
        $region38: #{tpu_custom_call.1} parent=31 // pred_check_branch
          %230 = sbr.rel (%p227) target = $region40
        $region39: #{tpu_custom_call.1} parent=31 // pred_region
          %v231 = vlaneseq
          %vm232 = vcmp.ge.s32.totalorder %v231, 0
          %vm233 = vcmp.lt.s32.totalorder %v231, 256
          %vm234 = vmand %vm232, %vm233
          %235 = vst.msk [vmem:[#allocation2] sm:$0x3] %vm234, 0.0
        $region40: #{tpu_custom_call.1} parent=31 // pred_fallthru
          _
        %v236 = vld [vmem:[%s189] sm:$0xff]
        %v237 = vld [vmem:[%s223] sm:$0x3]
        %v238 = vld [vmem:[%s2] sm:$0xf]
        %v240 = vcombine.high %v236, %v236
        %vm242 = vcmask 1043456
        %v243 = vsel %vm242, %v236, -inf
        %v244 = vrot.slane %v243, 4
        %v245 = vmax.f32 %v243, %v244
        %v246 = vrot.slane %v245, 2
        %v247 = vmax.f32 %v245, %v246
        %v248 = vrot.slane %v247, 1
        %v249 = vmax.f32 %v247, %v248
        %v250 = vsel %vm242, %v240, -inf
        %v251 = vrot.slane %v250, 4
        %v252 = vmax.f32 %v250, %v251
        %v253 = vrot.slane %v252, 2
        %v254 = vmax.f32 %v252, %v253
        %v255 = vrot.slane %v254, 1
        %v256 = vmax.f32 %v254, %v255
        %v259 = vcombine.low %v249, %v256
        %v261 = vsub.f32 %v236, %v259
        %v262 = vmul.f32 %v261, 1.442695
        %v263 = vpow.pop %v262
        %v265 = vcombine.high %v263, %v263
        %v267 = vsel %vm242, %v263, 0.0
        %v268 = vrot.slane %v267, 4
        %v269 = vadd.f32 %v267, %v268
        %v270 = vrot.slane %v269, 2
        %v271 = vadd.f32 %v269, %v270
        %v272 = vrot.slane %v271, 1
        %v273 = vadd.f32 %v271, %v272
        %v274 = vsel %vm242, %v265, 0.0
        %v275 = vrot.slane %v274, 4
        %v276 = vadd.f32 %v274, %v275
        %v277 = vrot.slane %v276, 2
        %v278 = vadd.f32 %v276, %v277
        %v279 = vrot.slane %v278, 1
        %v280 = vadd.f32 %v278, %v279
        %v281 = vlog2.pop %v273
        %v282 = vmul.f32 %v281, 0.6931472
        %v283 = vlog2.pop %v280
        %v284 = vmul.f32 %v283, 0.6931472
        %v285 = vlaneseq
        %v286 = vshrl.u32 %v285, 7
        %v287 = vlaneseq
        %v288 = vshrl.u32 %v287, 7
        %v289 = vsub.s32 0, %v288
        %v290 = vrot.slane %v237, %v289
        %v291 = vlaneseq
        %v292 = vshrl.u32 %v291, 7
        %v293 = vsub.s32 1, %v292
        %v294 = vrot.slane %v237, %v293
        %vm295 = vcmp.eq.s32.totalorder %v286, %v290
        %vm296 = vcmp.eq.s32.totalorder %v286, %v294
        %v297 = vsel %vm295, 1, 0
        %v298 = vsel %vm296, 1, 0
        %v299 = vcvt.s32.f32 %v297
        %v300 = vcvt.s32.f32 %v298
        %v303 = vcombine.low %v299, %v300
        %v305 = vmul.f32 %v236, %v303
        %v307 = vcombine.high %v305, %v305
        %v309 = vsel %vm242, %v305, 0.0
        %v310 = vrot.slane %v309, 4
        %v311 = vadd.f32 %v309, %v310
        %v312 = vrot.slane %v311, 2
        %v313 = vadd.f32 %v311, %v312
        %v314 = vrot.slane %v313, 1
        %v315 = vadd.f32 %v313, %v314
        %v316 = vsel %vm242, %v307, 0.0
        %v317 = vrot.slane %v316, 4
        %v318 = vadd.f32 %v316, %v317
        %v319 = vrot.slane %v318, 2
        %v320 = vadd.f32 %v318, %v319
        %v321 = vrot.slane %v320, 1
        %v322 = vadd.f32 %v320, %v321
        %324 = vset.pattern.permute.xlu0 0
        %325 = vperm.xlu0 %324, %v238
        %v326 = vpop.permute.xlu0 %325
        %v328 = vmul.f32 %v326, %v299
        %v329 = vmul.f32 %v326, %v300
        %v330 = vsel %vm242, %v328, 0.0
        %v331 = vrot.slane %v330, 4
        %v332 = vadd.f32 %v330, %v331
        %v333 = vrot.slane %v332, 2
        %v334 = vadd.f32 %v332, %v333
        %v335 = vrot.slane %v334, 1
        %v336 = vadd.f32 %v334, %v335
        %v337 = vsel %vm242, %v329, 0.0
        %v338 = vrot.slane %v337, 4
        %v339 = vadd.f32 %v337, %v338
        %v340 = vrot.slane %v339, 2
        %v341 = vadd.f32 %v339, %v340
        %v342 = vrot.slane %v341, 1
        %v343 = vadd.f32 %v341, %v342
        %v344 = vsub.f32 %v315, %v249
        %v345 = vsub.f32 %v322, %v256
        %v346 = vsub.f32 %v344, %v282
        %v347 = vsub.f32 %v345, %v284
        %v348 = vmul.f32 %v346, 1.442695
        %v349 = vpow.pop %v348
        %v350 = vmul.f32 %v347, 1.442695
        %v351 = vpow.pop %v350
        %v352 = vmax.f32 %v349, 1e-08
        %v353 = vmax.f32 %v351, 1e-08
        %v354 = vmin.f32 %v352, 1.0
        %v355 = vmin.f32 %v353, 1.0
        %v356 = vmax.f32 %v346, -18.420681
        %v357 = vmax.f32 %v347, -18.420681
        %v358 = vmin.f32 %v356, -1e-08
        %v359 = vmin.f32 %v357, -1e-08
        %v360 = vsub.f32 1.0, %v354
        %v361 = vsub.f32 1.0, %v355
        %v362 = vmul.f32 %v360, %v360
        %v363 = vmul.f32 %v361, %v361
        %v364 = vmul.f32 %v336, %v362
        %v365 = vmul.f32 %v343, %v363
        %v366 = vmul.f32 %v364, %v358
        %v367 = vmul.f32 %v365, %v359
        %v368 = vsub.f32 0.0, %v366
        %v369 = vsub.f32 0.0, %v367
        %v370 = vld [vmem:[#allocation2] sm:$0x3]
        %v373 = vcombine.low %v368, %v369
        %v375 = vunpack.c.l.s4 1966171168
        %v376 = vunpack.c.0.s8 %v375
        %v377 = vlaneseq
        %v378 = vshrl.u32 %v377, 7
        %v379 = vsub.s32 %v376, %v378
        %v380 = vrot.slane %v373, %v379
        %v382 = vunpack.c.l.s4 1966171168
        %v383 = vunpack.c.0.s8 %v382
        %v384 = vlaneseq
        %v385 = vshrl.u32 %v384, 7
        %v386 = vsub.s32 %v383, %v385
        %v387 = vrot.slane %v380, %v386
        %v389 = vadd.f32 %v370, %v387
        %v390 = vlaneseq
        %vm391 = vcmp.ge.s32.totalorder %v390, 0
        %vm392 = vcmp.lt.s32.totalorder %v390, 256
        %vm393 = vmand %vm391, %vm392
        %394 = vst.msk [vmem:[#allocation2] sm:$0x3] %vm393, %v389
        %p395 = scmp.eq.s32.totalorder %s22, 1
        %p396 = pnand %p395, %p226
        %p397 = pneg %p396
        // Predicated region
        $region41: #{tpu_custom_call.1} parent=31 // pred_check
          _
        $region42: #{tpu_custom_call.1} parent=31 // pred_check_branch
          %399 = sbr.rel (%p396) target = $region44
        $region43: #{tpu_custom_call.1} parent=31 // pred_region
          %v400 = vld [vmem:[#allocation2] sm:$0x3]
          %v402 = vlaneseq
          %v403 = vshrl.u32 %v402, 7
          %v404 = vsub.s32 0, %v403
          %v405 = vrot.slane %v400, %v404
          %v406 = vlaneseq
          %v407 = vshrl.u32 %v406, 7
          %v408 = vsub.s32 1, %v407
          %v409 = vrot.slane %v400, %v408
          %vm412 = vcmask 1040384
          %v413 = vsel %vm412, %v405, 0.0
          %v414 = vsel %vm412, %v409, 0.0
          %v415 = vadd.f32 %v413, %v414
          %416 = vadd.xlane.f32.xlu0 %v415
          %v417 = vpop.xlane.xlu0 %416
          %v418 = vrcp.pop 512.0
          %v419 = vmul.f32 %v417, %v418
          %vm420 = vcmask 0
          %421 = vst.msk [vmem:[#allocation6] sm:$0x1] %vm420, %v419
        $region44: #{tpu_custom_call.1} parent=31 // pred_fallthru
          _
        // Predicated region
        $region45: #{tpu_custom_call.1} parent=31 // pred_check
          %p422 = pneg %p120
        $region46: #{tpu_custom_call.1} parent=31 // pred_check_branch
          %424 = sbr.rel (%p422) target = $region48
        $region47: #{tpu_custom_call.1} parent=31 // pred_region
          %s426 = ssub.s32 16, 16
          %427 = vsyncadd [#allocation5], %s426
          %s429 = sshll.u32 [#allocation6], 4
          %s430 = int_to_ptr.vmem [resolvable:$true] %s429
          %432 = dma.vmem_to_hbm [thread:$0]  %s430, 16, %s3, [#allocation5]
        $region48: #{tpu_custom_call.1} parent=31 // pred_fallthru
          _
        // Predicated region
        $region49: #{tpu_custom_call.1} parent=31 // pred_check
          %p433 = pneg %p120
        $region50: #{tpu_custom_call.1} parent=31 // pred_check_branch
          %435 = sbr.rel (%p433) target = $region52
        $region51: #{tpu_custom_call.1} parent=31 // pred_region
          %436 = dma.done [#allocation5], 16
        $region52: #{tpu_custom_call.1} parent=31 // pred_fallthru
          _
      $region32: #{tpu_custom_call.1} parent=5 // pred_fallthru
        _
      %p437 = scmp.le.s32.totalorder 2, %s13
      // Predicated region
      $region53: #{tpu_custom_call.1} parent=5 // pred_check
        %p438 = pneg %p437
      $region54: #{tpu_custom_call.1} parent=5 // pred_check_branch
        %440 = sbr.rel (%p438) target = $region56
      $region55: #{tpu_custom_call.1} parent=5 // pred_region
        %s441 = ssub.s32 %s13, 2
      $region56: #{tpu_custom_call.1} parent=5 // pred_fallthru
        _
    $region6: #{tpu_custom_call.1} parent=1 // loop_footer
      %s17 = sadd.s32 1, %s13
    $region7: #{tpu_custom_call.1} parent=1 // loop_footer_branch
      %12 = sbr.rel target = $region3
    $region8: #{tpu_custom_call.1} parent=1 // loop_exit
      _
    %442 = vsyncpa [#allocation4], 1
    %s443 = scalar_lea.sflag [#allocation4], 1
    %444 = vsyncpa %s443, 1
    %445 = vsyncpa [#allocation5], 1
    %s446 = scalar_lea.sflag [#allocation5], 1
    %447 = vsyncpa %s446, 1

</llo_original>
